<compile_context>
chip_gen: v7x
topology: tpu7x:2x2x1
jax: 0.10.0
libtpu: 0.0.40
codegen_flags: <defaults>
</compile_context>

<pallas_src>
import functools
import math

import numpy as np
import jax
import jax.numpy as jnp
from jax.experimental import pallas as pl
from jax.experimental.pallas import tpu as pltpu

_NEG_BIG = -1e30
_VMEM_LIMIT = 48 * 1024 * 1024     # headroom below v7x's 64 MiB physical VMEM


# ----------------------------------------------------------------------------
# Kernel A: sparsity metric  M = max_s(QK_sample) - sum_s(QK_sample)/L_K
#   Tiled over L_K.  QK^T per tile on the MXU (bf16 in, f32 acc); sampling via
#   an additive bias (bf16) and a multiplicity matrix (bf16).  Running max/sum
#   kept in (1, L_Q) f32 VMEM scratch -> lane-dense output (B, 1, L_Q).
# ----------------------------------------------------------------------------
def _metric_kernel(q_ref, k_ref, bias_ref, cnt_ref, m_ref, mmax_s, msum_s, *, inv_LK):
    kstep = pl.program_id(1)

    @pl.when(kstep == 0)
    def _():
        mmax_s[...] = jnp.full_like(mmax_s, _NEG_BIG)
        msum_s[...] = jnp.zeros_like(msum_s)

    q = q_ref[0]                                           # (L_Q, E)   bf16
    k = k_ref[0]                                           # (tile_k,E) bf16
    # qk_t[k, q] = K[k] . Q[q]   (MXU, f32 accumulation)
    qk_t = jax.lax.dot_general(
        k, q, (((1,), (1,)), ((), ())), preferred_element_type=jnp.float32
    )                                                      # (tile_k, L_Q) f32
    masked = qk_t + bias_ref[...].astype(jnp.float32)      # additive sampling mask
    mmax_s[...] = jnp.maximum(mmax_s[...], jnp.max(masked, axis=0, keepdims=True))
    msum_s[...] = msum_s[...] + jnp.sum(
        qk_t * cnt_ref[...].astype(jnp.float32), axis=0, keepdims=True)

    @pl.when(kstep == pl.num_programs(1) - 1)
    def _():
        m_ref[0] = mmax_s[...] - msum_s[...] * inv_LK


def sampled_metric(Q_bf16, K_bf16, bias_t, cnt_t, *, tile_k):
    B, L_Q, E = Q_bf16.shape
    _, L_K, _ = K_bf16.shape
    n_k = L_K // tile_k
    kern = functools.partial(_metric_kernel, inv_LK=1.0 / float(L_K))
    m = pl.pallas_call(
        kern,
        out_shape=jax.ShapeDtypeStruct((B, 1, L_Q), jnp.float32),
        grid=(B, n_k),
        in_specs=[
            pl.BlockSpec((1, L_Q, E), lambda b, k: (b, 0, 0)),     # Q, resident per b
            pl.BlockSpec((1, tile_k, E), lambda b, k: (b, k, 0)),  # K tile
            pl.BlockSpec((tile_k, L_Q), lambda b, k: (k, 0)),      # bias tile (bf16)
            pl.BlockSpec((tile_k, L_Q), lambda b, k: (k, 0)),      # count tile (bf16)
        ],
        out_specs=pl.BlockSpec((1, 1, L_Q), lambda b, k: (b, 0, 0)),
        scratch_shapes=[pltpu.VMEM((1, L_Q), jnp.float32),
                        pltpu.VMEM((1, L_Q), jnp.float32)],
        compiler_params=pltpu.CompilerParams(
            dimension_semantics=("parallel", "arbitrary"),
            vmem_limit_bytes=_VMEM_LIMIT),
    )(Q_bf16, K_bf16, bias_t, cnt_t)
    return m[:, 0, :]                                      # (B, L_Q)


# ----------------------------------------------------------------------------
# Kernel B: fused  [tiled cumsum(V) context]  +  [top-u attention]  +  [scatter]
#   Grid (B, L_V/tile_l).  At l==0: gather Q_reduce via one-hot MXU matmul,
#   compute the top-u attention rows (f32 softmax, EUP reciprocal) into scratch.
#   Every l step: tile_tri @ V_tile + carried prefix, then one-hot MXU scatter
#   of the top-u rows with a row-mask select.  Single HBM write per tile.
# ----------------------------------------------------------------------------
def _context_kernel(mtop_lane_ref, mtop_sub_ref, q_ref, k_ref, v_ref, tri_ref,
                    o_ref, prefix_s, outu_s, *, scale, tile_l, u, L_Q):
    l = pl.program_id(1)
    tl = tile_l

    @pl.when(l == 0)
    def _():
        prefix_s[...] = jnp.zeros_like(prefix_s)
        # --- top-u attention, computed once per batch ---
        # Q_reduce = one_hot(M_top) @ Q  (exact row gather on the MXU)
        mtop_sub = mtop_sub_ref[0]                                       # (u, 1)
        iota_q = jax.lax.broadcasted_iota(jnp.int32, (u, L_Q), 1)
        oh_q = (iota_q == mtop_sub).astype(jnp.bfloat16)                 # (u, L_Q)
        q_red = jnp.dot(oh_q, q_ref[0],
                        preferred_element_type=jnp.float32)              # (u, E)
        # scores = Q_reduce @ K^T * scale ; f32 softmax with EUP reciprocal
        s = jax.lax.dot_general(
            q_red.astype(jnp.bfloat16), k_ref[0],
            (((1,), (1,)), ((), ())), preferred_element_type=jnp.float32) * scale
        s = s - jnp.max(s, axis=-1, keepdims=True)
        p = jnp.exp(s)
        p = p * pl.reciprocal(jnp.sum(p, axis=-1, keepdims=True), approx=True)
        outu_s[...] = jnp.dot(p.astype(jnp.bfloat16),
                              v_ref[0].astype(jnp.bfloat16),
                              preferred_element_type=jnp.float32)        # (u, D)

    # --- tiled cumsum: local lower-triangular matmul + carried prefix ---
    start = pl.multiple_of(l * tl, tl)
    v_tile = v_ref[0, pl.ds(start, tl), :]                               # (tl, D) f32
    ctx = jnp.dot(tri_ref[...], v_tile,
                  preferred_element_type=jnp.float32) + prefix_s[...]
    prefix_s[...] = ctx[tl - 1:tl, :]                                    # new prefix

    # --- one-hot MXU scatter of the top-u rows into this tile ---
    mtop_lane = mtop_lane_ref[0]                                         # (1, u)
    iota_r = jax.lax.broadcasted_iota(jnp.int32, (tl, u), 0) + l * tl
    oh = (iota_r == mtop_lane).astype(jnp.float32)                       # (tl, u)
    scattered = jnp.dot(oh, outu_s[...], preferred_element_type=jnp.float32)
    row_hit = jnp.sum(oh, axis=1, keepdims=True) > 0.0                   # (tl, 1)
    o_ref[0] = jnp.where(row_hit, scattered, ctx)


def attn_context(M_top, Q_bf16, K_bf16, V, tri_tile, scale, *, tile_l):
    B, L_Q, E = Q_bf16.shape
    _, L_K, _ = K_bf16.shape
    _, L_V, D = V.shape
    u = M_top.shape[-1]
    n_l = L_V // tile_l
    mtop_lane = M_top.reshape(B, 1, u).astype(jnp.int32)   # lane layout (scatter)
    mtop_sub = M_top.reshape(B, u, 1).astype(jnp.int32)    # sublane layout (gather)
    kern = functools.partial(_context_kernel, scale=float(scale),
                             tile_l=tile_l, u=u, L_Q=L_Q)
    return pl.pallas_call(
        kern,
        out_shape=jax.ShapeDtypeStruct((B, L_V, D), jnp.float32),
        grid=(B, n_l),
        in_specs=[
            pl.BlockSpec((1, 1, u), lambda b, l: (b, 0, 0)),
            pl.BlockSpec((1, u, 1), lambda b, l: (b, 0, 0)),
            pl.BlockSpec((1, L_Q, E), lambda b, l: (b, 0, 0)),   # Q, resident per b
            pl.BlockSpec((1, L_K, E), lambda b, l: (b, 0, 0)),   # K, resident per b
            pl.BlockSpec((1, L_V, D), lambda b, l: (b, 0, 0)),   # V, resident per b
            # constant block index -> fetched once, stays resident
            pl.BlockSpec((tile_l, tile_l), lambda b, l: (0, 0)),
        ],
        out_specs=pl.BlockSpec((1, tile_l, D), lambda b, l: (b, l, 0)),
        scratch_shapes=[pltpu.VMEM((1, D), jnp.float32),    # cumsum prefix carry
                        pltpu.VMEM((u, D), jnp.float32)],   # top-u attention rows
        compiler_params=pltpu.CompilerParams(
            dimension_semantics=("parallel", "arbitrary"),
            vmem_limit_bytes=_VMEM_LIMIT),
    )(mtop_lane, mtop_sub, Q_bf16, K_bf16, V, tri_tile)


# ----------------------------------------------------------------------------
# Full ProbAttention forward (mask_flag=True, output_attention=False)
# ----------------------------------------------------------------------------
def prob_attention(queries, keys, values, *, factor=5, scale=None, sample_key=None):
    B, L_Q, D = queries.shape
    _, L_K, E = keys.shape
    _, L_V, _ = values.shape
    assert L_Q == L_V  # required by the mask_flag=True (cumsum) branch

    U_part = min(factor * int(np.ceil(np.log(L_K))), L_K)
    u = min(factor * int(np.ceil(np.log(L_Q))), L_Q)

    # torch.randint(L_K, (L_Q, sample_k)) equivalent (deterministic key).
    index_sample = jax.random.randint(sample_key, (L_Q, U_part), 0, L_K)
    # Batch-independent sample multiplicity matrix + additive mask bias (bf16):
    # replaces the huge (B, L_Q, U_part, E) K_sample gather entirely.
    cnt = jnp.zeros((L_Q, L_K), jnp.float32).at[
        jnp.arange(L_Q)[:, None], index_sample].add(1.0)
    cnt_t = cnt.T                                                     # (L_K, L_Q)
    bias_t = jnp.where(cnt_t > 0.0, 0.0, _NEG_BIG).astype(jnp.bfloat16)
    cnt_t = cnt_t.astype(jnp.bfloat16)

    # Q/K enter the kernels as bf16 (the matmuls consume bf16 anyway).
    q_bf = queries.astype(jnp.bfloat16)
    k_bf = keys.astype(jnp.bfloat16)

    tile_k = L_K if L_K <= 256 else 256
    assert L_K % tile_k == 0
    M = sampled_metric(q_bf, k_bf, bias_t, cnt_t, tile_k=tile_k)      # (B, L_Q)

    # TODO(synk): top_k has no clean Pallas equivalent; kept in plain JAX.
    _, M_top = jax.lax.top_k(M, u)                                    # (B, u)
    M_top = M_top.astype(jnp.int32)

    sc = scale if scale is not None else 1.0 / math.sqrt(D)

    tile_l = L_V if L_V <= 256 else 256
    assert L_V % tile_l == 0
    tri_tile = jnp.tril(jnp.ones((tile_l, tile_l), jnp.float32))      # tiny, per-tile

    context = attn_context(M_top, q_bf, k_bf, values, tri_tile, sc, tile_l=tile_l)
    return context, None                                              # output_attention=False


# ----------------------------------------------------------------------------
# Pure-JAX reference (gather-based, as in the PyTorch module).  Matmul inputs
# are rounded to bf16 exactly like the kernels so the comparison is tight; the
# small residual slack covers MXU accumulation order + the EUP approx reciprocal.
# ----------------------------------------------------------------------------
def _reference(queries, keys, values, *, factor=5, scale=None, sample_key=None):
    B, L_Q, D = queries.shape
    _, L_K, _ = keys.shape
    U_part = min(factor * int(np.ceil(np.log(L_K))), L_K)
    u = min(factor * int(np.ceil(np.log(L_Q))), L_Q)
    index_sample = jax.random.randint(sample_key, (L_Q, U_part), 0, L_K)
    K_sample = jnp.take(keys, index_sample, axis=1)          # (B, L_Q, S, E)
    QK_sample = jnp.einsum("bqe,bqse->bqs",
                           queries.astype(jnp.bfloat16), K_sample.astype(jnp.bfloat16),
                           preferred_element_type=jnp.float32)
    M = QK_sample.max(-1) - QK_sample.sum(-1) / L_K
    _, M_top = jax.lax.top_k(M, u)
    Q_reduce = jnp.take_along_axis(queries, M_top[..., None], axis=1)
    sc = scale if scale is not None else 1.0 / math.sqrt(D)
    scores = jnp.einsum("bue,bke->buk",
                        Q_reduce.astype(jnp.bfloat16), keys.astype(jnp.bfloat16),
                        preferred_element_type=jnp.float32) * sc
    attn = jax.nn.softmax(scores, axis=-1)
    out = jnp.einsum("buk,bkd->bud",
                     attn.astype(jnp.bfloat16), values.astype(jnp.bfloat16),
                     preferred_element_type=jnp.float32)
    ctx = jnp.cumsum(values, axis=1)
    ctx = ctx.at[jnp.arange(B)[:, None], M_top, :].set(out)
    return ctx


if __name__ == "__main__":
    key = jax.random.PRNGKey(0)
    kq, kk, kv, ksamp = jax.random.split(key, 4)

    B, L, D = 2, 64, 32          # factor=5 -> U_part = u = 25 < 64 (real sparsity)
    Q = jax.random.normal(kq, (B, L, D), jnp.float32)
    K = jax.random.normal(kk, (B, L, D), jnp.float32)
    V = jax.random.normal(kv, (B, L, D), jnp.float32)

    context, attn = prob_attention(Q, K, V, factor=5, sample_key=ksamp)
    context = jax.block_until_ready(context)

    ref = jax.block_until_ready(_reference(Q, K, V, factor=5, sample_key=ksamp))
    np.testing.assert_allclose(np.asarray(context), np.asarray(ref),
                               rtol=2e-2, atol=2e-2)
    assert attn is None

    print("KERNEL_OK")
</pallas_src>

<mosaic_0001>
module attributes {stable_mosaic.version = 11 : i64} {
  func.func @_metric_kernel(%arg0: i32, %arg1: i32, %arg2: memref<1x64x32xbf16, #tpu.memory_space<vmem>>, %arg3: memref<1x64x32xbf16, #tpu.memory_space<vmem>>, %arg4: memref<64x64xbf16, #tpu.memory_space<vmem>>, %arg5: memref<64x64xbf16, #tpu.memory_space<vmem>>, %arg6: memref<1x1x64xf32, #tpu.memory_space<vmem>>, %arg7: memref<1x64xf32, #tpu.memory_space<vmem>>, %arg8: memref<1x64xf32, #tpu.memory_space<vmem>>) attributes {dimension_semantics = [#tpu.dimension_semantics<parallel>, #tpu.dimension_semantics<arbitrary>], iteration_bounds = array<i64: 2, 1>, scalar_prefetch = 0 : i64, scratch_operands = 2 : i64, tpu.core_type = #tpu.core_type<tc>, window_params = [{transform_indices = @transform_0, window_bounds = array<i64: 1, 64, 32>}, {transform_indices = @transform_1, window_bounds = array<i64: 1, 64, 32>}, {transform_indices = @transform_2, window_bounds = array<i64: 64, 64>}, {transform_indices = @transform_3, window_bounds = array<i64: 64, 64>}, {transform_indices = @transform_4, window_bounds = array<i64: 1, 1, 64>}]} {
    %c0_i32 = arith.constant 0 : i32
    %0 = arith.cmpi eq, %arg1, %c0_i32 : i32
    %1 = arith.extui %0 : i1 to i32
    %c0_i32_0 = arith.constant 0 : i32
    %2 = arith.cmpi ne, %1, %c0_i32_0 : i32
    scf.if %2 {
      %cst_22 = arith.constant -1.000000e+30 : f32
      %27 = vector.broadcast %cst_22 : f32 to vector<1x64xf32>
      %c0_23 = arith.constant 0 : index
      %c0_24 = arith.constant 0 : index
      %28 = vector.load %arg7[%c0_23, %c0_24] : memref<1x64xf32, #tpu.memory_space<vmem>>, vector<1x64xf32>
      tpu.vector_store %arg7[%c0_23, %c0_24], %27 {strides = array<i32>} : memref<1x64xf32, #tpu.memory_space<vmem>>, vector<1x64xf32>,
      %cst_25 = arith.constant 0.000000e+00 : f32
      %29 = vector.broadcast %cst_25 : f32 to vector<1x64xf32>
      %c0_26 = arith.constant 0 : index
      %c0_27 = arith.constant 0 : index
      %30 = vector.load %arg8[%c0_26, %c0_27] : memref<1x64xf32, #tpu.memory_space<vmem>>, vector<1x64xf32>
      tpu.vector_store %arg8[%c0_26, %c0_27], %29 {strides = array<i32>} : memref<1x64xf32, #tpu.memory_space<vmem>>, vector<1x64xf32>,
    } else {
    }
    %c0 = arith.constant 0 : index
    %c0_1 = arith.constant 0 : index
    %c0_2 = arith.constant 0 : index
    %3 = vector.load %arg2[%c0, %c0_1, %c0_2] : memref<1x64x32xbf16, #tpu.memory_space<vmem>>, vector<1x64x32xbf16>
    %4 = vector.shape_cast %3 : vector<1x64x32xbf16> to vector<64x32xbf16>
    %c0_3 = arith.constant 0 : index
    %c0_4 = arith.constant 0 : index
    %c0_5 = arith.constant 0 : index
    %5 = vector.load %arg3[%c0_3, %c0_4, %c0_5] : memref<1x64x32xbf16, #tpu.memory_space<vmem>>, vector<1x64x32xbf16>
    %6 = vector.shape_cast %5 : vector<1x64x32xbf16> to vector<64x32xbf16>
    %cst = arith.constant dense<0.000000e+00> : vector<64x64xf32>
    %7 = tpu.matmul %6, %4, %cst {dimension_numbers = #tpu.dot_dimension_numbers<[1], [1], [0], [0], [0, 0, 1, 0], [], []>} : vector<64x32xbf16>, vector<64x32xbf16>, vector<64x64xf32> -> vector<64x64xf32>
    %c0_6 = arith.constant 0 : index
    %c0_7 = arith.constant 0 : index
    %8 = vector.load %arg4[%c0_6, %c0_7] : memref<64x64xbf16, #tpu.memory_space<vmem>>, vector<64x64xbf16>
    %9 = arith.extf %8 : vector<64x64xbf16> to vector<64x64xf32>
    %10 = arith.addf %7, %9 : vector<64x64xf32>
    %c0_8 = arith.constant 0 : index
    %c0_9 = arith.constant 0 : index
    %11 = vector.load %arg7[%c0_8, %c0_9] : memref<1x64xf32, #tpu.memory_space<vmem>>, vector<1x64xf32>
    %cst_10 = arith.constant dense<0xFF800000> : vector<64xf32>
    %12 = vector.multi_reduction <maximumf>, %10, %cst_10 [0] : vector<64x64xf32> to vector<64xf32>
    %13 = vector.shape_cast %12 : vector<64xf32> to vector<1x64xf32>
    %14 = arith.maximumf %11, %13 : vector<1x64xf32>
    %c0_11 = arith.constant 0 : index
    %c0_12 = arith.constant 0 : index
    %15 = vector.load %arg7[%c0_11, %c0_12] : memref<1x64xf32, #tpu.memory_space<vmem>>, vector<1x64xf32>
    tpu.vector_store %arg7[%c0_11, %c0_12], %14 {strides = array<i32>} : memref<1x64xf32, #tpu.memory_space<vmem>>, vector<1x64xf32>,
    %c0_13 = arith.constant 0 : index
    %c0_14 = arith.constant 0 : index
    %16 = vector.load %arg8[%c0_13, %c0_14] : memref<1x64xf32, #tpu.memory_space<vmem>>, vector<1x64xf32>
    %c0_15 = arith.constant 0 : index
    %c0_16 = arith.constant 0 : index
    %17 = vector.load %arg5[%c0_15, %c0_16] : memref<64x64xbf16, #tpu.memory_space<vmem>>, vector<64x64xbf16>
    %18 = arith.extf %17 : vector<64x64xbf16> to vector<64x64xf32>
    %19 = arith.mulf %7, %18 : vector<64x64xf32>
    %cst_17 = arith.constant dense<0.000000e+00> : vector<64xf32>
    %20 = vector.multi_reduction <add>, %19, %cst_17 [0] : vector<64x64xf32> to vector<64xf32>
    %21 = vector.shape_cast %20 : vector<64xf32> to vector<1x64xf32>
    %22 = arith.addf %16, %21 : vector<1x64xf32>
    %c0_18 = arith.constant 0 : index
    %c0_19 = arith.constant 0 : index
    %23 = vector.load %arg8[%c0_18, %c0_19] : memref<1x64xf32, #tpu.memory_space<vmem>>, vector<1x64xf32>
    tpu.vector_store %arg8[%c0_18, %c0_19], %22 {strides = array<i32>} : memref<1x64xf32, #tpu.memory_space<vmem>>, vector<1x64xf32>,
    %c0_i32_20 = arith.constant 0 : i32
    %24 = arith.cmpi eq, %arg1, %c0_i32_20 : i32
    %25 = arith.extui %24 : i1 to i32
    %c0_i32_21 = arith.constant 0 : i32
    %26 = arith.cmpi ne, %25, %c0_i32_21 : i32
    scf.if %26 {
      %c0_22 = arith.constant 0 : index
      %c0_23 = arith.constant 0 : index
      %27 = vector.load %arg7[%c0_22, %c0_23] : memref<1x64xf32, #tpu.memory_space<vmem>>, vector<1x64xf32>
      %c0_24 = arith.constant 0 : index
      %c0_25 = arith.constant 0 : index
      %28 = vector.load %arg8[%c0_24, %c0_25] : memref<1x64xf32, #tpu.memory_space<vmem>>, vector<1x64xf32>
      %cst_26 = arith.constant 1.562500e-02 : f32
      %29 = vector.broadcast %cst_26 : f32 to vector<1x64xf32>
      %30 = arith.mulf %28, %29 : vector<1x64xf32>
      %31 = arith.subf %27, %30 : vector<1x64xf32>
      %c0_27 = arith.constant 0 : index
      %c0_28 = arith.constant 0 : index
      %c0_29 = arith.constant 0 : index
      %32 = vector.load %arg6[%c0_27, %c0_28, %c0_29] : memref<1x1x64xf32, #tpu.memory_space<vmem>>, vector<1x1x64xf32>
      %33 = vector.shape_cast %32 : vector<1x1x64xf32> to vector<1x64xf32>
      %34 = vector.shape_cast %31 : vector<1x64xf32> to vector<1x1x64xf32>
      tpu.vector_store %arg6[%c0_27, %c0_28, %c0_29], %34 {strides = array<i32>} : memref<1x1x64xf32, #tpu.memory_space<vmem>>, vector<1x1x64xf32>,
    } else {
    }
    return
  }
  func.func @transform_0(%arg0: i32, %arg1: i32) -> (i32, i32, i32) {
    %c0_i32 = arith.constant 0 : i32
    %c0_i32_0 = arith.constant 0 : i32
    %c0_i32_1 = arith.constant 0 : i32
    return %arg0, %c0_i32, %c0_i32_0 : i32, i32, i32
  }
  func.func @transform_1(%arg0: i32, %arg1: i32) -> (i32, i32, i32) {
    %c0_i32 = arith.constant 0 : i32
    %c0_i32_0 = arith.constant 0 : i32
    return %arg0, %arg1, %c0_i32 : i32, i32, i32
  }
  func.func @transform_2(%arg0: i32, %arg1: i32) -> (i32, i32) {
    %c0_i32 = arith.constant 0 : i32
    %c0_i32_0 = arith.constant 0 : i32
    return %arg1, %c0_i32 : i32, i32
  }
  func.func @transform_3(%arg0: i32, %arg1: i32) -> (i32, i32) {
    %c0_i32 = arith.constant 0 : i32
    %c0_i32_0 = arith.constant 0 : i32
    return %arg1, %c0_i32 : i32, i32
  }
  func.func @transform_4(%arg0: i32, %arg1: i32) -> (i32, i32, i32) {
    %c0_i32 = arith.constant 0 : i32
    %c0_i32_0 = arith.constant 0 : i32
    %c0_i32_1 = arith.constant 0 : i32
    return %arg0, %c0_i32, %c0_i32_0 : i32, i32, i32
  }
}

</mosaic_0001>

<llo_original>
// kernel: tpu_custom_call.1
$region0: #{tpu_custom_call.1}
  #allocation0 [shape = 'u32[]', space=smem, size = 0x4, offset = 0x4, fixed_abs, tag = 'smem constant byte address 0x4 - core index']
  #allocation1 [shape = 'u32[144,128]{1,0:T(1,128)}', space=vmem, size = 0x12000, scoped, tag = 'internal scratch']
  #allocation2 [shape = 'f32[1,64]{1,0:T(1,128)}', space=vmem, size = 0x200, scoped, tag = 'scratch operand']
  #allocation3 [shape = 'f32[1,64]{1,0:T(1,128)}', space=vmem, size = 0x200, scoped, tag = 'scratch operand']
  %s0 = inlined_call_operand.vmem [shape: bf16[2,64,32], index: 0, kind: input, shape index: {}]
  %s1 = inlined_call_operand.vmem [shape: bf16[2,64,32], index: 1, kind: input, shape index: {}]
  %s2 = inlined_call_operand.vmem [shape: bf16[64,64], index: 2, kind: input, shape index: {}]
  %s3 = inlined_call_operand.vmem [shape: bf16[64,64], index: 3, kind: input, shape index: {}]
  %s4 = inlined_call_operand.hbm [shape: f32[2,1,64], index: 4, kind: output, shape index: {}]
  %s5 = sld [smem:[#allocation0]]
  $region57: #{tpu_custom_call.1} parent=0
    _
  %s7 = ssub.s32 1, %s5
  %s8 = scalar_select 0, %s7, %s5
  $region1: #{tpu_custom_call.1} parent=0
    #allocation4 [shape = 'u8[1024]{0}', space=vmem, size = 0x400, scoped, tag = 'output window, operand 0']
    #allocation5 [shape = 's32[2]{0}', space=sflag, size = 0x8, scoped, tag = 'scoped memory for tpu_custom_call.1']
    %9 = vsyncpa [#allocation5], 0
    %s10 = scalar_lea.sflag [#allocation5], 1
    %11 = vsyncpa %s10, 0
    loop: start=0, step=1, limit=4
    $region2: #{tpu_custom_call.1} parent=1 // loop_pre_header
      _
    $region3: #{tpu_custom_call.1} parent=1 // loop_header
      %s13 = sphi 0, %s17
      %p14 = scmp.ge.s32.totalorder %s13, 4
      %s20 = sphi 0, %s32
      %s21 = sphi 0, %s28
      %s22 = sphi 0, %s20
      %s23 = sphi 0, %s21
      %s24 = sphi 0, %s22
      %s25 = sphi 0, %s23
      %s35 = sphi 0, %s37
      %s38 = sphi 0, %s35
      %s39 = sphi 0, %s38
      %s55 = sphi 0, %s39
      %s63 = sphi 0, %s65
      %s66 = sphi 0, %s63
      %s67 = sphi 0, %s66
      %s83 = sphi 0, %s67
      %s89 = sphi 0, %s91
      %s92 = sphi 0, %s89
      %s93 = sphi 0, %s92
      %s109 = sphi 0, %s93
      %s115 = sphi 0, %s117
      %s118 = sphi 0, %s115
      %s119 = sphi 0, %s118
      %s135 = sphi 0, %s119
      %s141 = sphi 0, %s143
      %s144 = sphi 0, %s141
      %s145 = sphi 0, %s144
      %s161 = sphi 0, %s145
    $region4: #{tpu_custom_call.1} parent=1 // loop_header_branch
      %16 = sbr.rel (%p14) target = $region8
    $region5: #{tpu_custom_call.1} parent=1 // loop_body
      %s18 = ssub.s32 %s13, 1
      %s19 = ssub.s32 %s13, 2
      %s26 = sadd.s32 1, %s21
      %p27 = scmp.ge.s32.totalorder %s26, 1
      %s28 = scalar_select %p27, 0, %s26
      %s29 = sadd.s32 1, %s20
      %s30 = scalar_select %p27, %s29, %s20
      %p31 = scmp.ge.s32.totalorder %s30, 2
      %s32 = scalar_select %p31, 0, %s30
      %s33 = ssub.s32 %s20, %s32
      %p34 = scmp.eq.s32.totalorder %s33, 0
      %s36 = sadd.s32 %s35, 1
      %s37 = scalar_select %p34, %s35, %s36
      %p40 = pneg %p34
      %p41 = scmp.eq.s32.totalorder %s13, 1
      %p42 = por %p40, %p41
      %p43 = scmp.ne.s32.totalorder %s35, %s38
      %p44 = scmp.eq.s32.totalorder %s13, 0
      %p45 = por %p43, %p44
      %p46 = scmp.ne.s32.totalorder %s35, %s38
      %p47 = scmp.eq.s32.totalorder %s18, 1
      %p48 = por %p46, %p47
      %p49 = scmp.ne.s32.totalorder %s38, %s39
      %p50 = scmp.eq.s32.totalorder %s18, 0
      %p51 = por %p49, %p50
      %p52 = scmp.ne.s32.totalorder %s38, %s39
      %p53 = scmp.eq.s32.totalorder %s19, 1
      %p54 = por %p52, %p53
      %p56 = scmp.ne.s32.totalorder %s39, %s55
      %p57 = scmp.eq.s32.totalorder %s19, 0
      %p58 = por %p56, %p57
      %s59 = ssub.s32 %s20, %s32
      %s60 = ssub.s32 %s21, %s28
      %s61 = sor.u32 %s59, %s60
      %p62 = scmp.eq.s32.totalorder %s61, 0
      %s64 = sadd.s32 %s63, 1
      %s65 = scalar_select %p62, %s63, %s64
      %p68 = pneg %p62
      %p69 = scmp.eq.s32.totalorder %s13, 1
      %p70 = por %p68, %p69
      %p71 = scmp.ne.s32.totalorder %s63, %s66
      %p72 = scmp.eq.s32.totalorder %s13, 0
      %p73 = por %p71, %p72
      %p74 = scmp.ne.s32.totalorder %s63, %s66
      %p75 = scmp.eq.s32.totalorder %s18, 1
      %p76 = por %p74, %p75
      %p77 = scmp.ne.s32.totalorder %s66, %s67
      %p78 = scmp.eq.s32.totalorder %s18, 0
      %p79 = por %p77, %p78
      %p80 = scmp.ne.s32.totalorder %s66, %s67
      %p81 = scmp.eq.s32.totalorder %s19, 1
      %p82 = por %p80, %p81
      %p84 = scmp.ne.s32.totalorder %s67, %s83
      %p85 = scmp.eq.s32.totalorder %s19, 0
      %p86 = por %p84, %p85
      %s87 = ssub.s32 %s21, %s28
      %p88 = scmp.eq.s32.totalorder %s87, 0
      %s90 = sadd.s32 %s89, 1
      %s91 = scalar_select %p88, %s89, %s90
      %p94 = pneg %p88
      %p95 = scmp.eq.s32.totalorder %s13, 1
      %p96 = por %p94, %p95
      %p97 = scmp.ne.s32.totalorder %s89, %s92
      %p98 = scmp.eq.s32.totalorder %s13, 0
      %p99 = por %p97, %p98
      %p100 = scmp.ne.s32.totalorder %s89, %s92
      %p101 = scmp.eq.s32.totalorder %s18, 1
      %p102 = por %p100, %p101
      %p103 = scmp.ne.s32.totalorder %s92, %s93
      %p104 = scmp.eq.s32.totalorder %s18, 0
      %p105 = por %p103, %p104
      %p106 = scmp.ne.s32.totalorder %s92, %s93
      %p107 = scmp.eq.s32.totalorder %s19, 1
      %p108 = por %p106, %p107
      %p110 = scmp.ne.s32.totalorder %s93, %s109
      %p111 = scmp.eq.s32.totalorder %s19, 0
      %p112 = por %p110, %p111
      %s113 = ssub.s32 %s21, %s28
      %p114 = scmp.eq.s32.totalorder %s113, 0
      %s116 = sadd.s32 %s115, 1
      %s117 = scalar_select %p114, %s115, %s116
      %p120 = pneg %p114
      %p121 = scmp.eq.s32.totalorder %s13, 1
      %p122 = por %p120, %p121
      %p123 = scmp.ne.s32.totalorder %s115, %s118
      %p124 = scmp.eq.s32.totalorder %s13, 0
      %p125 = por %p123, %p124
      %p126 = scmp.ne.s32.totalorder %s115, %s118
      %p127 = scmp.eq.s32.totalorder %s18, 1
      %p128 = por %p126, %p127
      %p129 = scmp.ne.s32.totalorder %s118, %s119
      %p130 = scmp.eq.s32.totalorder %s18, 0
      %p131 = por %p129, %p130
      %p132 = scmp.ne.s32.totalorder %s118, %s119
      %p133 = scmp.eq.s32.totalorder %s19, 1
      %p134 = por %p132, %p133
      %p136 = scmp.ne.s32.totalorder %s119, %s135
      %p137 = scmp.eq.s32.totalorder %s19, 0
      %p138 = por %p136, %p137
      %s139 = ssub.s32 %s20, %s32
      %p140 = scmp.eq.s32.totalorder %s139, 0
      %s142 = sadd.s32 %s141, 1
      %s143 = scalar_select %p140, %s141, %s142
      %p146 = pneg %p140
      %p147 = scmp.eq.s32.totalorder %s13, 1
      %p148 = por %p146, %p147
      %p149 = scmp.ne.s32.totalorder %s141, %s144
      %p150 = scmp.eq.s32.totalorder %s13, 0
      %p151 = por %p149, %p150
      %p152 = scmp.ne.s32.totalorder %s141, %s144
      %p153 = scmp.eq.s32.totalorder %s18, 1
      %p154 = por %p152, %p153
      %p155 = scmp.ne.s32.totalorder %s144, %s145
      %p156 = scmp.eq.s32.totalorder %s18, 0
      %p157 = por %p155, %p156
      %p158 = scmp.ne.s32.totalorder %s144, %s145
      %p159 = scmp.eq.s32.totalorder %s19, 1
      %p160 = por %p158, %p159
      %p162 = scmp.ne.s32.totalorder %s145, %s161
      %p163 = scmp.eq.s32.totalorder %s19, 0
      %p164 = por %p162, %p163
      %p165 = scmp.le.s32.totalorder 1, %s13
      %p166 = scmp.lt.s32.totalorder %s13, 3
      %p167 = pnand %p165, %p166
      %p168 = pneg %p167
      // Predicated region
      $region9: #{tpu_custom_call.1} parent=5 // pred_check
        _
      $region10: #{tpu_custom_call.1} parent=5 // pred_check_branch
        %170 = sbr.rel (%p167) target = $region12
      $region11: #{tpu_custom_call.1} parent=5 // pred_region
        %s171 = ssub.s32 %s13, 1
        // Predicated region
        $region13: #{tpu_custom_call.1} parent=11 // pred_check
          %p172 = pneg %p105
        $region14: #{tpu_custom_call.1} parent=11 // pred_check_branch
          %174 = sbr.rel (%p172) target = $region16
        $region15: #{tpu_custom_call.1} parent=11 // pred_region
          %s175 = smul.u32 8, %s23
          %p176 = scmp.lt.s32.totalorder %s175, 7
          %s177 = scalar_select %p176, %s175, 7
          %s178 = smul.addr %s177, 4
          %s179 = scalar_lea.vmem %s2, %s178
          %s180 = smul.u32 8, %s23
        $region16: #{tpu_custom_call.1} parent=11 // pred_fallthru
          _
        // Predicated region
        $region17: #{tpu_custom_call.1} parent=11 // pred_check
          %p181 = pneg %p131
        $region18: #{tpu_custom_call.1} parent=11 // pred_check_branch
          %183 = sbr.rel (%p181) target = $region20
        $region19: #{tpu_custom_call.1} parent=11 // pred_region
          %s184 = smul.u32 8, %s23
          %p185 = scmp.lt.s32.totalorder %s184, 7
          %s186 = scalar_select %p185, %s184, 7
          %s187 = smul.addr %s186, 4
          %s188 = scalar_lea.vmem %s3, %s187
          %s189 = smul.u32 8, %s23
        $region20: #{tpu_custom_call.1} parent=11 // pred_fallthru
          _
      $region12: #{tpu_custom_call.1} parent=5 // pred_fallthru
        _
      %p190 = scmp.lt.s32.totalorder %s13, 2
      // Predicated region
      $region21: #{tpu_custom_call.1} parent=5 // pred_check
        %p191 = pneg %p190
      $region22: #{tpu_custom_call.1} parent=5 // pred_check_branch
        %193 = sbr.rel (%p191) target = $region24
      $region23: #{tpu_custom_call.1} parent=5 // pred_region
        // Predicated region
        $region25: #{tpu_custom_call.1} parent=23 // pred_check
          %p194 = pneg %p45
        $region26: #{tpu_custom_call.1} parent=23 // pred_check_branch
          %196 = sbr.rel (%p194) target = $region28
        $region27: #{tpu_custom_call.1} parent=23 // pred_region
          %p197 = scmp.lt.s32.totalorder %s20, 1
          %s198 = scalar_select %p197, %s20, 1
          %s199 = smul.addr %s198, 8
          %s200 = smul.addr %s199, 4
          %s201 = scalar_lea.vmem %s0, %s200
        $region28: #{tpu_custom_call.1} parent=23 // pred_fallthru
          _
        // Predicated region
        $region29: #{tpu_custom_call.1} parent=23 // pred_check
          %p202 = pneg %p73
        $region30: #{tpu_custom_call.1} parent=23 // pred_check_branch
          %204 = sbr.rel (%p202) target = $region32
        $region31: #{tpu_custom_call.1} parent=23 // pred_region
          %s205 = smul.u32 8, %s21
          %p206 = scmp.lt.s32.totalorder %s20, 1
          %s207 = scalar_select %p206, %s20, 1
          %p208 = scmp.lt.s32.totalorder %s205, 7
          %s209 = scalar_select %p208, %s205, 7
          %s210 = smul.addr %s207, 8
          %s211 = sadd.s32 %s209, %s210
          %s212 = smul.addr %s211, 4
          %s213 = scalar_lea.vmem %s1, %s212
          %s214 = smul.u32 8, %s21
        $region32: #{tpu_custom_call.1} parent=23 // pred_fallthru
          _
      $region24: #{tpu_custom_call.1} parent=5 // pred_fallthru
        _
      %p215 = scmp.le.s32.totalorder 1, %s13
      %p216 = scmp.lt.s32.totalorder %s13, 3
      %p217 = pnand %p215, %p216
      %p218 = pneg %p217
      // Predicated region
      $region33: #{tpu_custom_call.1} parent=5 // pred_check
        _
      $region34: #{tpu_custom_call.1} parent=5 // pred_check_branch
        %220 = sbr.rel (%p217) target = $region36
      $region35: #{tpu_custom_call.1} parent=5 // pred_region
        %s221 = ssub.s32 %s13, 1
        %p222 = scmp.lt.s32.totalorder %s22, 1
        %s223 = scalar_select %p222, %s22, 1
        %s224 = smul.addr %s223, 8
        %s225 = smul.addr %s224, 4
        %s226 = scalar_lea.vmem %s0, %s225
        %p227 = pneg %p51
        %p228 = pneg %p48
        %s229 = smul.u32 8, %s23
        %p230 = scmp.lt.s32.totalorder %s22, 1
        %s231 = scalar_select %p230, %s22, 1
        %p232 = scmp.lt.s32.totalorder %s229, 7
        %s233 = scalar_select %p232, %s229, 7
        %s234 = smul.addr %s231, 8
        %s235 = sadd.s32 %s233, %s234
        %s236 = smul.addr %s235, 4
        %s237 = scalar_lea.vmem %s1, %s236
        %p238 = pneg %p79
        %p239 = pneg %p76
        %s240 = smul.u32 8, %s23
        %p241 = scmp.lt.s32.totalorder %s240, 7
        %s242 = scalar_select %p241, %s240, 7
        %s243 = smul.addr %s242, 4
        %s244 = scalar_lea.vmem %s2, %s243
        %p245 = pneg %p105
        %p246 = pneg %p102
        %s247 = smul.u32 8, %s23
        %p248 = scmp.lt.s32.totalorder %s247, 7
        %s249 = scalar_select %p248, %s247, 7
        %s250 = smul.addr %s249, 4
        %s251 = scalar_lea.vmem %s3, %s250
        %p252 = pneg %p131
        %p253 = pneg %p128
        %p254 = pneg %p157
        %p255 = pneg %p154
        %s256 = sand.u32 %s144, 1
        %s257 = scalar_lea.sflag [#allocation5], %s256
        %s258 = sand.u32 %s144, 1
        %s259 = scalar_lea.vmem [#allocation4], %s258
        %p260 = scmp.lt.s32.totalorder %s22, 1
        %s261 = scalar_select %p260, %s22, 1
        %s262 = smul.addr %s261, 8
        %s263 = smul.addr %s262, 4
        %s264 = scalar_lea.vmem %s0, %s263
        %s265 = smul.u32 8, %s23
        %p266 = scmp.lt.s32.totalorder %s22, 1
        %s267 = scalar_select %p266, %s22, 1
        %p268 = scmp.lt.s32.totalorder %s265, 7
        %s269 = scalar_select %p268, %s265, 7
        %s270 = smul.addr %s267, 8
        %s271 = sadd.s32 %s269, %s270
        %s272 = smul.addr %s271, 4
        %s273 = scalar_lea.vmem %s1, %s272
        %s274 = smul.u32 8, %s23
        %s275 = smul.u32 8, %s23
        %p276 = scmp.lt.s32.totalorder %s275, 7
        %s277 = scalar_select %p276, %s275, 7
        %s278 = smul.addr %s277, 4
        %s279 = scalar_lea.vmem %s2, %s278
        %s280 = smul.u32 8, %s23
        %s281 = smul.u32 8, %s23
        %p282 = scmp.lt.s32.totalorder %s281, 7
        %s283 = scalar_select %p282, %s281, 7
        %s284 = smul.addr %s283, 4
        %s285 = scalar_lea.vmem %s3, %s284
        %s286 = smul.u32 8, %s23
        %p288 = scmp.eq.s32.totalorder %s23, 0
        // Predicated region
        $region37: #{tpu_custom_call.1} parent=35 // pred_check
          %p289 = pneg %p288
        $region38: #{tpu_custom_call.1} parent=35 // pred_check_branch
          %291 = sbr.rel (%p289) target = $region40
        $region39: #{tpu_custom_call.1} parent=35 // pred_region
          %vm292 = vcmask 516096
          %293 = vst.msk [vmem:[#allocation2] sm:$0x1] %vm292, -1e+30
          %294 = vst.msk [vmem:[#allocation3] sm:$0x1] %vm292, 0.0
        $region40: #{tpu_custom_call.1} parent=35 // pred_fallthru
          _
        %v295 = vld [vmem:[%s264] sm:$0xf]
        %v296 = vld [vmem:[%s264 + $0x4] sm:$0xf]
        %v297 = vld [vmem:[%s264 + $0x8] sm:$0xf]
        %v298 = vld [vmem:[%s264 + $0xc] sm:$0xf]
        %v299 = vld [vmem:[%s264 + $0x10] sm:$0xf]
        %v300 = vld [vmem:[%s264 + $0x14] sm:$0xf]
        %v301 = vld [vmem:[%s264 + $0x18] sm:$0xf]
        %v302 = vld [vmem:[%s264 + $0x1c] sm:$0xf]
        %v303 = vld [vmem:[%s273] sm:$0xf]
        %v304 = vld [vmem:[%s273 + $0x4] sm:$0xf]
        %v305 = vld [vmem:[%s273 + $0x8] sm:$0xf]
        %v306 = vld [vmem:[%s273 + $0xc] sm:$0xf]
        %v307 = vld [vmem:[%s273 + $0x10] sm:$0xf]
        %v308 = vld [vmem:[%s273 + $0x14] sm:$0xf]
        %v309 = vld [vmem:[%s273 + $0x18] sm:$0xf]
        %v310 = vld [vmem:[%s273 + $0x1c] sm:$0xf]
        %v319 = vunpack.c.l.b16 %v303
        %v320 = vunpack.c.l.b16 %v304
        %v321 = vunpack.c.l.b16 %v305
        %v322 = vunpack.c.l.b16 %v306
        %v323 = vunpack.c.l.b16 %v307
        %v324 = vunpack.c.l.b16 %v308
        %v325 = vunpack.c.l.b16 %v309
        %v326 = vunpack.c.l.b16 %v310
        %v327 = vpack.c.b16 %v320, %v319
        %v328 = vpack.c.b16 %v322, %v321
        %v329 = vpack.c.b16 %v324, %v323
        %v330 = vpack.c.b16 %v326, %v325
        %v339 = vunpack.c.l.b16 %v295
        %v340 = vunpack.c.l.b16 %v296
        %v341 = vunpack.c.l.b16 %v297
        %v342 = vunpack.c.l.b16 %v298
        %v343 = vunpack.c.l.b16 %v299
        %v344 = vunpack.c.l.b16 %v300
        %v345 = vunpack.c.l.b16 %v301
        %v346 = vunpack.c.l.b16 %v302
        %v347 = vpack.c.b16 %v340, %v339
        %v348 = vpack.c.b16 %v342, %v341
        %v349 = vpack.c.b16 %v344, %v343
        %v350 = vpack.c.b16 %v346, %v345
        %vm351 = vcmask 261120
        %v353 = vsel %vm351, %v327, 0
        %v356 = vsel %vm351, %v328, 0
        %v359 = vsel %vm351, %v329, 0
        %v362 = vsel %vm351, %v330, 0
        %v365 = vsel %vm351, %v347, 0
        %v368 = vsel %vm351, %v348, 0
        %v371 = vsel %vm351, %v349, 0
        %v374 = vsel %vm351, %v350, 0
        %376 = vmatprep.subr.bf16.mxu0 0
        %377 = vmatpush1.bf16.xpose.msra.mxu0 %v365
        %378 = vmatprep.subr.bf16.mxu0 0
        %379 = vmatpush1.bf16.xpose.msra.mxu0 %v368
        %380 = vmatprep.subr.bf16.mxu0 0
        %381 = vmatpush1.bf16.xpose.msra.mxu0 %v371
        %382 = vmatprep.subr.bf16.mxu0 0
        %383 = vmatpush1.bf16.xpose.msra.mxu0 %v374
        %384 = vmatprep.subr.bf16.mxu0 0
        %385 = vmatpush1.bf16.xpose.msra.mxu0 0
        %386 = vmatprep.subr.bf16.mxu0 0
        %387 = vmatpush1.bf16.xpose.msra.mxu0 0
        %388 = vmatprep.subr.bf16.mxu0 0
        %389 = vmatpush1.bf16.xpose.msra.mxu0 0
        %390 = vmatprep.subr.bf16.mxu0 0
        %391 = vmatpush1.bf16.xpose.msra.mxu0 0
        %392 = vmatprep.subr.bf16.mxu0 0
        %393 = vmatpush1.bf16.xpose.msra.mxu0 0
        %394 = vmatprep.subr.bf16.mxu0 0
        %395 = vmatpush1.bf16.xpose.msra.mxu0 0
        %396 = vmatprep.subr.bf16.mxu0 0
        %397 = vmatpush1.bf16.xpose.msra.mxu0 0
        %398 = vmatprep.subr.bf16.mxu0 0
        %399 = vmatpush1.bf16.xpose.msra.mxu0 0
        %400 = vmatprep.subr.bf16.mxu0 0
        %401 = vmatpush1.bf16.xpose.msra.mxu0 0
        %402 = vmatprep.subr.bf16.mxu0 0
        %403 = vmatpush1.bf16.xpose.msra.mxu0 0
        %404 = vmatprep.subr.bf16.mxu0 0
        %405 = vmatpush1.bf16.xpose.msra.mxu0 0
        %406 = vmatprep.subr.bf16.mxu0 0
        %407 = vmatpush1.bf16.xpose.msra.mxu0 0
        %408 = vmatprep.mubr.bf16.mxu0 0
        %409 = vmatmul.mubr.bf16.gmra.mrb[0].mxu0 %v353
        %v410 = vpop.f32.mrb[0].mxu0
        %v411 = vadd.f32 0.0, %v410
        %v412 = vpop.f32.mrb[0].mxu0
        %v413 = vpop.f32.mrb[0].mxu0
        %v414 = vadd.f32 0.0, %v413
        %v415 = vpop.f32.mrb[0].mxu0
        %416 = vmatprep.mubr.bf16.mxu0 0
        %417 = vmatmul.mubr.bf16.gmra.mrb[0].mxu0 %v356
        %v418 = vpop.f32.mrb[0].mxu0
        %v419 = vadd.f32 0.0, %v418
        %v420 = vpop.f32.mrb[0].mxu0
        %v421 = vpop.f32.mrb[0].mxu0
        %v422 = vadd.f32 0.0, %v421
        %v423 = vpop.f32.mrb[0].mxu0
        %424 = vmatprep.mubr.bf16.mxu0 0
        %425 = vmatmul.mubr.bf16.gmra.mrb[0].mxu0 %v359
        %v426 = vpop.f32.mrb[0].mxu0
        %v427 = vadd.f32 0.0, %v426
        %v428 = vpop.f32.mrb[0].mxu0
        %v429 = vpop.f32.mrb[0].mxu0
        %v430 = vadd.f32 0.0, %v429
        %v431 = vpop.f32.mrb[0].mxu0
        %432 = vmatprep.mubr.bf16.mxu0 0
        %433 = vmatmul.mubr.bf16.gmra.mrb[0].mxu0 %v362
        %v434 = vpop.f32.mrb[0].mxu0
        %v435 = vadd.f32 0.0, %v434
        %v436 = vpop.f32.mrb[0].mxu0
        %v437 = vpop.f32.mrb[0].mxu0
        %v438 = vadd.f32 0.0, %v437
        %v439 = vpop.f32.mrb[0].mxu0
        %440 = vdwg.mxu0
        %v441 = vld [vmem:[%s279] sm:$0xf]
        %v442 = vld [vmem:[%s279 + $0x4] sm:$0xf]
        %v443 = vld [vmem:[%s279 + $0x8] sm:$0xf]
        %v444 = vld [vmem:[%s279 + $0xc] sm:$0xf]
        %v445 = vld [vmem:[%s279 + $0x10] sm:$0xf]
        %v446 = vld [vmem:[%s279 + $0x14] sm:$0xf]
        %v447 = vld [vmem:[%s279 + $0x18] sm:$0xf]
        %v448 = vld [vmem:[%s279 + $0x1c] sm:$0xf]
        %v449 = vunpack.c.l.bf16 %v441
        %v450 = vunpack.c.l.bf16 %v442
        %v451 = vunpack.c.l.bf16 %v443
        %v452 = vunpack.c.l.bf16 %v444
        %v453 = vunpack.c.l.bf16 %v445
        %v454 = vunpack.c.l.bf16 %v446
        %v455 = vunpack.c.l.bf16 %v447
        %v456 = vunpack.c.l.bf16 %v448
        %v457 = vadd.f32 %v411, %v449
        %v458 = vadd.f32 %v414, %v450
        %v459 = vadd.f32 %v419, %v451
        %v460 = vadd.f32 %v422, %v452
        %v461 = vadd.f32 %v427, %v453
        %v462 = vadd.f32 %v430, %v454
        %v463 = vadd.f32 %v435, %v455
        %v464 = vadd.f32 %v438, %v456
        %v465 = vld [vmem:[#allocation2] sm:$0x1]
        %vm466 = vcmask 523264
        %v467 = vsel %vm466, %v457, -inf
        %v468 = vsel %vm466, %v458, -inf
        %v469 = vsel %vm466, %v459, -inf
        %v470 = vsel %vm466, %v460, -inf
        %v471 = vsel %vm466, %v461, -inf
        %v472 = vmax.f32 %v467, %v471
        %v473 = vsel %vm466, %v462, -inf
        %v474 = vmax.f32 %v468, %v473
        %v475 = vsel %vm466, %v463, -inf
        %v476 = vmax.f32 %v469, %v475
        %v477 = vsel %vm466, %v464, -inf
        %v478 = vmax.f32 %v470, %v477
        %v479 = vmax.f32 %v472, %v474
        %v480 = vmax.f32 %v476, %v478
        %v481 = vmax.f32 %v479, %v480
        %v482 = vrot.slane %v481, 4
        %v483 = vmax.f32 %v481, %v482
        %v484 = vrot.slane %v483, 2
        %v485 = vmax.f32 %v483, %v484
        %v486 = vrot.slane %v485, 1
        %v487 = vmax.f32 %v485, %v486
        %v488 = vmax.f32 %v465, %v487
        %vm489 = vcmask 516096
        %490 = vst.msk [vmem:[#allocation2] sm:$0x1] %vm489, %v488
        %v491 = vld [vmem:[#allocation3] sm:$0x1]
        %v492 = vld [vmem:[%s285] sm:$0xf]
        %v493 = vld [vmem:[%s285 + $0x4] sm:$0xf]
        %v494 = vld [vmem:[%s285 + $0x8] sm:$0xf]
        %v495 = vld [vmem:[%s285 + $0xc] sm:$0xf]
        %v496 = vld [vmem:[%s285 + $0x10] sm:$0xf]
        %v497 = vld [vmem:[%s285 + $0x14] sm:$0xf]
        %v498 = vld [vmem:[%s285 + $0x18] sm:$0xf]
        %v499 = vld [vmem:[%s285 + $0x1c] sm:$0xf]
        %v500 = vunpack.c.l.bf16 %v492
        %v501 = vunpack.c.l.bf16 %v493
        %v502 = vunpack.c.l.bf16 %v494
        %v503 = vunpack.c.l.bf16 %v495
        %v504 = vunpack.c.l.bf16 %v496
        %v505 = vunpack.c.l.bf16 %v497
        %v506 = vunpack.c.l.bf16 %v498
        %v507 = vunpack.c.l.bf16 %v499
        %v508 = vmul.f32 %v411, %v500
        %v509 = vmul.f32 %v414, %v501
        %v510 = vmul.f32 %v419, %v502
        %v511 = vmul.f32 %v422, %v503
        %v512 = vmul.f32 %v427, %v504
        %v513 = vmul.f32 %v430, %v505
        %v514 = vmul.f32 %v435, %v506
        %v515 = vmul.f32 %v438, %v507
        %v516 = vsel %vm466, %v508, 0.0
        %v517 = vsel %vm466, %v509, 0.0
        %v518 = vadd.f32 %v516, %v517
        %v519 = vsel %vm466, %v510, 0.0
        %v520 = vadd.f32 %v518, %v519
        %v521 = vsel %vm466, %v511, 0.0
        %v522 = vadd.f32 %v520, %v521
        %v523 = vsel %vm466, %v512, 0.0
        %v524 = vadd.f32 %v522, %v523
        %v525 = vsel %vm466, %v513, 0.0
        %v526 = vadd.f32 %v524, %v525
        %v527 = vsel %vm466, %v514, 0.0
        %v528 = vadd.f32 %v526, %v527
        %v529 = vsel %vm466, %v515, 0.0
        %v530 = vadd.f32 %v528, %v529
        %v531 = vrot.slane %v530, 4
        %v532 = vadd.f32 %v530, %v531
        %v533 = vrot.slane %v532, 2
        %v534 = vadd.f32 %v532, %v533
        %v535 = vrot.slane %v534, 1
        %v536 = vadd.f32 %v534, %v535
        %v537 = vadd.f32 %v491, %v536
        %538 = vst.msk [vmem:[#allocation3] sm:$0x1] %vm489, %v537
        // Predicated region
        $region41: #{tpu_custom_call.1} parent=35 // pred_check
          %p539 = pneg %p288
        $region42: #{tpu_custom_call.1} parent=35 // pred_check_branch
          %541 = sbr.rel (%p539) target = $region44
        $region43: #{tpu_custom_call.1} parent=35 // pred_region
          %v542 = vld [vmem:[#allocation2] sm:$0x1]
          %v543 = vld [vmem:[#allocation3] sm:$0x1]
          %v544 = vmul.f32 %v543, 0.015625
          %v545 = vsub.f32 %v542, %v544
          %546 = vst.msk [vmem:[%s259] sm:$0x1] %vm489, %v545
        $region44: #{tpu_custom_call.1} parent=35 // pred_fallthru
          _
        %s547 = sand.u32 %s144, 1
        %s548 = scalar_lea.sflag [#allocation5], %s547
        %s549 = sand.u32 %s144, 1
        %s550 = scalar_lea.vmem [#allocation4], %s549
        // Predicated region
        $region45: #{tpu_custom_call.1} parent=35 // pred_check
          %p551 = pneg %p154
        $region46: #{tpu_custom_call.1} parent=35 // pred_check_branch
          %553 = sbr.rel (%p551) target = $region48
        $region47: #{tpu_custom_call.1} parent=35 // pred_region
          %s555 = ssub.s32 16, 16
          %556 = vsyncadd %s548, %s555
          %s557 = smul.addr %s22, 16
          %s558 = scalar_lea.hbm %s4, %s557
          %s560 = sshll.u32 %s550, 4
          %s561 = int_to_ptr.vmem [resolvable:$true] %s560
          %563 = dma.vmem_to_hbm [thread:$0]  %s561, 16, %s558, %s548
        $region48: #{tpu_custom_call.1} parent=35 // pred_fallthru
          _
      $region36: #{tpu_custom_call.1} parent=5 // pred_fallthru
        _
      %p564 = scmp.le.s32.totalorder 2, %s13
      // Predicated region
      $region49: #{tpu_custom_call.1} parent=5 // pred_check
        %p565 = pneg %p564
      $region50: #{tpu_custom_call.1} parent=5 // pred_check_branch
        %567 = sbr.rel (%p565) target = $region52
      $region51: #{tpu_custom_call.1} parent=5 // pred_region
        %s568 = ssub.s32 %s13, 2
        // Predicated region
        $region53: #{tpu_custom_call.1} parent=51 // pred_check
          %p569 = pneg %p160
        $region54: #{tpu_custom_call.1} parent=51 // pred_check_branch
          %571 = sbr.rel (%p569) target = $region56
        $region55: #{tpu_custom_call.1} parent=51 // pred_region
          %s572 = sand.u32 %s145, 1
          %s573 = scalar_lea.sflag [#allocation5], %s572
          %s574 = sand.u32 %s145, 1
          %s575 = scalar_lea.vmem [#allocation4], %s574
          %576 = dma.done %s573, 16
        $region56: #{tpu_custom_call.1} parent=51 // pred_fallthru
          _
      $region52: #{tpu_custom_call.1} parent=5 // pred_fallthru
        _
    $region6: #{tpu_custom_call.1} parent=1 // loop_footer
      %s17 = sadd.s32 1, %s13
    $region7: #{tpu_custom_call.1} parent=1 // loop_footer_branch
      %12 = sbr.rel target = $region3
    $region8: #{tpu_custom_call.1} parent=1 // loop_exit
      _
    %577 = vsyncpa [#allocation5], 1
    %s578 = scalar_lea.sflag [#allocation5], 1
    %579 = vsyncpa %s578, 1

</llo_original>
